<compile_context>
chip_gen: v7x
topology: tpu7x:2x2x1
jax: 0.10.0
libtpu: 0.0.40
codegen_flags: <defaults>
</compile_context>

<pallas_src>
import math
from typing import Dict, List, Sequence, Tuple, Union

import jax
import jax.numpy as jnp
from jax.experimental import pallas as pl
from jax.experimental.pallas import tpu as pltpu

_TK_CAP = 512    # max reduction (K) tile
_TN_CAP = 256    # max output-feature (N) tile
_TM_CAP = 2048   # max row tile


def _round_up(x: int, m: int) -> int:
    return ((x + m - 1) // m) * m


def _vmem_budget_bytes() -> int:
    """Per-generation VMEM working budget: physical capacity minus headroom.
    v5e/v6e (128 MiB) -> ~104 MiB; v7x (64 MiB/TC) -> ~40 MiB."""
    cap = 64 * 1024 * 1024  # conservative default = v7x per-TC VMEM
    try:
        info = pltpu.get_tpu_info()
        cap = int(getattr(info, "vmem_capacity_bytes", cap))
    except Exception:
        pass
    return max(cap - 24 * 1024 * 1024, 16 * 1024 * 1024)


# ----------------------------------------------------------------------------
# Fused grouped-linear kernel with K accumulation.
#   x_ref : (tm, tk)      row-tile x K-tile of the stacked activations
#   w_ref : (1, tk, tn)   weight tile of this row-tile's group
#   b_ref : (1, 1, tn)    (zero-padded) f32 bias tile of this group
#   o_ref : (tm, tn)      lane-dense output tile
#   acc_ref: (tm, tn) f32 VMEM accumulator (persists across the K grid axis)
# ----------------------------------------------------------------------------
def _grouped_linear_kernel(gid_ref, x_ref, w_ref, b_ref, o_ref, acc_ref):
    del gid_ref  # only used by the index_maps (scalar prefetch)
    k = pl.program_id(2)

    @pl.when(k == 0)
    def _():
        acc_ref[...] = jnp.zeros_like(acc_ref)

    acc_ref[...] += jnp.dot(
        x_ref[...], w_ref[0], preferred_element_type=jnp.float32
    )

    @pl.when(k == pl.num_programs(2) - 1)
    def _():
        o_ref[...] = (acc_ref[...] + b_ref[0]).astype(o_ref.dtype)


def _choose_row_tile(row_counts: List[int], tk: int, tn: int, *, x_bytes: int,
                     w_bytes: int, out_bytes: int, budget_bytes: int,
                     row_mult: int) -> int:
    """Largest row tile (multiple of row_mult, <= _TM_CAP) whose double-buffered
    working set fits the per-generation VMEM budget, then capped so per-key
    row padding does not blow up total rows by more than ~25%."""
    # double-buffered x/w/b blocks + double-buffered out block + f32 acc scratch
    fixed = 2 * (tk * tn * w_bytes + tn * 4)
    per_row = 2 * tk * x_bytes + 2 * tn * out_bytes + tn * 4
    cap = (budget_bytes - fixed) // max(per_row, 1)
    tm = max(row_mult, min(_TM_CAP, (int(cap) // row_mult) * row_mult))
    tm = min(tm, _round_up(max(row_counts), row_mult))

    total = sum(row_counts)
    while tm > 128:
        padded = sum(_round_up(m, tm) for m in row_counts)
        if padded <= 1.25 * total:
            break
        tm //= 2
    tm = max(row_mult, (tm // row_mult) * row_mult)
    return tm


def grouped_linear(x_stacked: jax.Array, w_stacked: jax.Array,
                   b_stacked: jax.Array, group_ids: jax.Array, *,
                   tm: int, tk: int, tn: int, out_dtype,
                   vmem_limit_bytes: int) -> jax.Array:
    """y[t*tm:(t+1)*tm] = x[t*tm:(t+1)*tm] @ W[gid[t]] + b[gid[t]]  (K,N tiled)."""
    Mtot, Kp = x_stacked.shape
    G, Kp_w, Np = w_stacked.shape
    assert Kp_w == Kp and Mtot % tm == 0 and Kp % tk == 0 and Np % tn == 0
    nt, nn, nk = Mtot // tm, Np // tn, Kp // tk

    grid_spec = pltpu.PrefetchScalarGridSpec(
        num_scalar_prefetch=1,
        grid=(nt, nn, nk),
        in_specs=[
            pl.BlockSpec((tm, tk), lambda t, n, k, gid: (t, k)),
            pl.BlockSpec((1, tk, tn), lambda t, n, k, gid: (gid[t], k, n)),
            pl.BlockSpec((1, 1, tn), lambda t, n, k, gid: (gid[t], 0, n)),
        ],
        out_specs=pl.BlockSpec((tm, tn), lambda t, n, k, gid: (t, n)),
        scratch_shapes=[pltpu.VMEM((tm, tn), jnp.float32)],
    )

    xb = jnp.dtype(x_stacked.dtype).itemsize
    wb = jnp.dtype(w_stacked.dtype).itemsize
    ob = jnp.dtype(out_dtype).itemsize
    flops = 2 * Mtot * Kp * Np
    bytes_accessed = (Mtot * Kp * xb * nn + G * Kp * Np * wb
                      + G * Np * 4 + Mtot * Np * ob)

    return pl.pallas_call(
        _grouped_linear_kernel,
        out_shape=jax.ShapeDtypeStruct((Mtot, Np), out_dtype),
        grid_spec=grid_spec,
        compiler_params=pltpu.CompilerParams(
            dimension_semantics=("parallel", "parallel", "arbitrary"),
            vmem_limit_bytes=int(vmem_limit_bytes),
        ),
        cost_estimate=pl.CostEstimate(
            flops=flops, transcendentals=0, bytes_accessed=bytes_accessed
        ),
    )(group_ids, x_stacked, w_stacked, b_stacked)


# ----------------------------------------------------------------------------
# JAX equivalent of metatensor.learn.nn.Linear (per-key linear over a
# dict-of-blocks "TensorMap").
# ----------------------------------------------------------------------------
class PallasTensorMapLinear:
    def __init__(
        self,
        in_keys: Sequence[Tuple],
        in_features: Union[int, List[int]],
        out_features: Union[int, List[int]],
        *,
        bias: Union[bool, List[bool]] = True,
        dtype=jnp.float32,
        compute_dtype=jnp.bfloat16,
        key: jax.Array = None,
    ):
        n = len(in_keys)
        if isinstance(in_features, int):
            in_features = [in_features] * n
        if isinstance(out_features, int):
            out_features = [out_features] * n
        if isinstance(bias, bool):
            bias = [bias] * n
        assert len(in_features) == n and len(out_features) == n and len(bias) == n

        self.in_keys = list(in_keys)
        self.in_features = list(in_features)
        self.out_features = list(out_features)
        self.dtype = dtype
        self.compute_dtype = compute_dtype
        # bf16 packs two rows per sublane: keep row tiles multiples of 16.
        self._row_mult = 16 if jnp.dtype(compute_dtype).itemsize < 4 else 8
        self._vmem_budget = _vmem_budget_bytes()

        if key is None:
            key = jax.random.PRNGKey(0)

        # deterministic init matching torch.nn.Linear defaults:
        # W, b ~ U(-1/sqrt(in_features), 1/sqrt(in_features))
        self.weights = []   # (N_i, K_i), param dtype, kept for the reference
        self.biases = []    # (N_i,) or None
        for i in range(n):
            key, kw, kb = jax.random.split(key, 3)
            bound = 1.0 / math.sqrt(in_features[i])
            w = jax.random.uniform(
                kw, (out_features[i], in_features[i]), dtype=jnp.float32,
                minval=-bound, maxval=bound,
            ).astype(dtype)
            b = (
                jax.random.uniform(
                    kb, (out_features[i],), dtype=jnp.float32,
                    minval=-bound, maxval=bound,
                ).astype(dtype)
                if bias[i]
                else None
            )
            self.weights.append(w)
            self.biases.append(b)

        # Bucket keys by their lane-padded (K, N) so heterogeneous feature
        # sizes do not all pay the global-max padding; one fused pallas_call
        # per bucket. Weights are pre-transposed (K, N), zero-padded to a
        # tk/tn-aligned (Kp, Np), stacked, and stored in compute_dtype ONCE.
        sig_to_members: Dict[Tuple[int, int], List[int]] = {}
        for i in range(n):
            sig = (_round_up(in_features[i], 128), _round_up(out_features[i], 128))
            sig_to_members.setdefault(sig, []).append(i)

        self.buckets = []
        for (Kp0, Np0), members in sig_to_members.items():
            tk = min(Kp0, _TK_CAP)
            tn = min(Np0, _TN_CAP)
            Kp = _round_up(Kp0, tk)
            Np = _round_up(Np0, tn)
            G = len(members)
            w_st = jnp.zeros((G, Kp, Np), dtype=compute_dtype)
            # bias kept in f32: added on the f32 accumulator in the epilogue.
            b_st = jnp.zeros((G, 1, Np), dtype=jnp.float32)
            for g, i in enumerate(members):
                K_i, N_i = in_features[i], out_features[i]
                w_st = w_st.at[g, :K_i, :N_i].set(
                    self.weights[i].T.astype(compute_dtype))
                if self.biases[i] is not None:
                    b_st = b_st.at[g, 0, :N_i].set(
                        self.biases[i].astype(jnp.float32))
            self.buckets.append(
                dict(members=members, Kp=Kp, Np=Np, tk=tk, tn=tn, w=w_st, b=b_st)
            )

    def __call__(self, tensor: Dict[Tuple, jax.Array]) -> Dict[Tuple, jax.Array]:
        out: Dict[Tuple, jax.Array] = {}
        # TODO(synk): for very small memory-bound blocks a plain XLA einsum
        # fallback (skipping the stacking glue) would be cheaper; kept on the
        # Pallas path here so the fused kernel is always exercised.
        cd_bytes = jnp.dtype(self.compute_dtype).itemsize
        out_bytes = jnp.dtype(self.dtype).itemsize

        for bucket in self.buckets:
            members = bucket["members"]
            Kp, Np, tk, tn = bucket["Kp"], bucket["Np"], bucket["tk"], bucket["tn"]

            row_counts = []
            for i in members:
                x = tensor[self.in_keys[i]]
                assert x.shape[-1] == self.in_features[i], (
                    f"block {self.in_keys[i]}: expected {self.in_features[i]} "
                    f"properties, got {x.shape[-1]}"
                )
                row_counts.append(int(math.prod(x.shape[:-1])))

            nonzero = [m for m in row_counts if m > 0]
            tm = (
                _choose_row_tile(
                    nonzero, tk, tn,
                    x_bytes=cd_bytes, w_bytes=cd_bytes, out_bytes=out_bytes,
                    budget_bytes=self._vmem_budget, row_mult=self._row_mult)
                if nonzero else self._row_mult
            )

            chunks: List[jax.Array] = []
            gids: List[int] = []
            placements = []  # (key, lead_shape, M, N_i, row_start)
            row_start = 0
            for g, i in enumerate(members):
                k_key = self.in_keys[i]
                x = tensor[k_key]
                lead = x.shape[:-1]
                M = row_counts[g]
                N_i = self.out_features[i]
                if M == 0:
                    out[k_key] = jnp.zeros(lead + (N_i,), dtype=self.dtype)
                    continue
                x2d = x.reshape((M, self.in_features[i])).astype(self.compute_dtype)
                rows_p = _round_up(M, tm)
                # pad rows -> tile multiple and K -> Kp; padded K columns hit
                # zero weight rows so they contribute nothing.
                xp = jnp.pad(x2d, ((0, rows_p - M), (0, Kp - x2d.shape[1])))
                chunks.append(xp)
                gids.extend([g] * (rows_p // tm))
                placements.append((k_key, lead, M, N_i, row_start))
                row_start += rows_p

            if not chunks:
                continue

            x_stacked = jnp.concatenate(chunks, axis=0) if len(chunks) > 1 else chunks[0]
            group_ids = jnp.asarray(gids, dtype=jnp.int32)

            y_stacked = grouped_linear(
                x_stacked, bucket["w"], bucket["b"], group_ids,
                tm=tm, tk=tk, tn=tn, out_dtype=self.dtype,
                vmem_limit_bytes=self._vmem_budget,
            )

            # un-stack: strip row padding and padded output columns
            for (k_key, lead, M, N_i, rs) in placements:
                out[k_key] = y_stacked[rs:rs + M, :N_i].reshape(lead + (N_i,))
        return out

    # pure-JAX reference for verification
    def reference(self, tensor: Dict[Tuple, jax.Array], *,
                  match_compute_dtype: bool = True) -> Dict[Tuple, jax.Array]:
        out = {}
        for i, k in enumerate(self.in_keys):
            x = tensor[k]
            if match_compute_dtype:
                xc = x.astype(self.compute_dtype)
                wc = self.weights[i].astype(self.compute_dtype)
            else:
                xc, wc = x, self.weights[i]
            y = jnp.einsum("...k,nk->...n", xc, wc,
                           preferred_element_type=jnp.float32)
            if self.biases[i] is not None:
                y = y + self.biases[i].astype(jnp.float32)
            out[k] = y.astype(self.dtype)
        return out


if __name__ == "__main__":
    root = jax.random.PRNGKey(0)
    k_model, k0, k1, k2 = jax.random.split(root, 4)

    # "TensorMap": 3 keys, per-key feature sizes, one block with a component axis
    # TODO(synk): metatensor Labels / out_properties metadata are represented as
    # plain dict keys here; only the numeric block transform is implemented.
    in_keys = [(0,), (1,), (2,)]
    in_features = [32, 16, 24]
    out_features = [16, 8, 12]

    blocks = {
        (0,): jax.random.normal(k0, (10, 32), dtype=jnp.float32),     # [samples, props]
        (1,): jax.random.normal(k1, (6, 3, 16), dtype=jnp.float32),   # [samples, comps, props]
        (2,): jax.random.normal(k2, (8, 24), dtype=jnp.float32),      # [samples, props]
    }

    model = PallasTensorMapLinear(
        in_keys, in_features, out_features, bias=True, key=k_model
    )

    out = model(blocks)
    out = {k: jax.block_until_ready(v) for k, v in out.items()}

    ref_matched = model.reference(blocks, match_compute_dtype=True)
    ref_f32 = model.reference(blocks, match_compute_dtype=False)
    for k in in_keys:
        assert out[k].shape == ref_f32[k].shape, (k, out[k].shape, ref_f32[k].shape)
        # kernel uses bf16 inputs / f32 accumulation: compare against the
        # matching-precision reference tightly, and the f32 reference coarsely.
        assert jnp.allclose(out[k], ref_matched[k], atol=2e-2, rtol=2e-2), \
            f"mismatch in block {k}"
        assert jnp.allclose(out[k], ref_f32[k], atol=6e-2, rtol=6e-2), \
            f"drift in block {k}"

    print("KERNEL_OK")
</pallas_src>

<mosaic_0001>
module attributes {stable_mosaic.version = 11 : i64} {
  func.func @_grouped_linear_kernel(%arg0: i32, %arg1: i32, %arg2: i32, %arg3: memref<3xi32, #tpu.memory_space<smem>>, %arg4: memref<32x128xbf16, #tpu.memory_space<vmem>>, %arg5: memref<1x128x128xbf16, #tpu.memory_space<vmem>>, %arg6: memref<1x1x128xf32, #tpu.memory_space<vmem>>, %arg7: memref<32x128xf32, #tpu.memory_space<vmem>>, %arg8: memref<32x128xf32, #tpu.memory_space<vmem>>) attributes {dimension_semantics = [#tpu.dimension_semantics<parallel>, #tpu.dimension_semantics<parallel>, #tpu.dimension_semantics<arbitrary>], iteration_bounds = array<i64: 3, 1, 1>, scalar_prefetch = 1 : i64, scratch_operands = 1 : i64, tpu.core_type = #tpu.core_type<tc>, window_params = [{transform_indices = @transform_0, window_bounds = array<i64: 32, 128>}, {transform_indices = @transform_1, window_bounds = array<i64: 1, 128, 128>}, {transform_indices = @transform_2, window_bounds = array<i64: 1, 1, 128>}, {transform_indices = @transform_3, window_bounds = array<i64: 32, 128>}]} {
    %c0_i32 = arith.constant 0 : i32
    %0 = arith.cmpi eq, %arg2, %c0_i32 : i32
    %1 = arith.extui %0 : i1 to i32
    %c0_i32_0 = arith.constant 0 : i32
    %2 = arith.cmpi ne, %1, %c0_i32_0 : i32
    scf.if %2 {
      %cst_11 = arith.constant 0.000000e+00 : f32
      %13 = vector.broadcast %cst_11 : f32 to vector<32x128xf32>
      %c0_12 = arith.constant 0 : index
      %c0_13 = arith.constant 0 : index
      %14 = vector.load %arg8[%c0_12, %c0_13] : memref<32x128xf32, #tpu.memory_space<vmem>>, vector<32x128xf32>
      tpu.vector_store %arg8[%c0_12, %c0_13], %13 {strides = array<i32>} : memref<32x128xf32, #tpu.memory_space<vmem>>, vector<32x128xf32>,
    } else {
    }
    %c0 = arith.constant 0 : index
    %c0_1 = arith.constant 0 : index
    %3 = vector.load %arg8[%c0, %c0_1] : memref<32x128xf32, #tpu.memory_space<vmem>>, vector<32x128xf32>
    %c0_2 = arith.constant 0 : index
    %c0_3 = arith.constant 0 : index
    %4 = vector.load %arg4[%c0_2, %c0_3] : memref<32x128xbf16, #tpu.memory_space<vmem>>, vector<32x128xbf16>
    %c0_4 = arith.constant 0 : index
    %c0_5 = arith.constant 0 : index
    %c0_6 = arith.constant 0 : index
    %5 = vector.load %arg5[%c0_4, %c0_5, %c0_6] : memref<1x128x128xbf16, #tpu.memory_space<vmem>>, vector<1x128x128xbf16>
    %6 = vector.shape_cast %5 : vector<1x128x128xbf16> to vector<128x128xbf16>
    %cst = arith.constant dense<0.000000e+00> : vector<32x128xf32>
    %7 = tpu.matmul %4, %6, %cst {dimension_numbers = #tpu.dot_dimension_numbers<[1], [0], [0], [1], [0, 0, 1, 1], [], []>} : vector<32x128xbf16>, vector<128x128xbf16>, vector<32x128xf32> -> vector<32x128xf32>
    %8 = arith.addf %3, %7 : vector<32x128xf32>
    %c0_7 = arith.constant 0 : index
    %c0_8 = arith.constant 0 : index
    %9 = vector.load %arg8[%c0_7, %c0_8] : memref<32x128xf32, #tpu.memory_space<vmem>>, vector<32x128xf32>
    tpu.vector_store %arg8[%c0_7, %c0_8], %8 {strides = array<i32>} : memref<32x128xf32, #tpu.memory_space<vmem>>, vector<32x128xf32>,
    %c0_i32_9 = arith.constant 0 : i32
    %10 = arith.cmpi eq, %arg2, %c0_i32_9 : i32
    %11 = arith.extui %10 : i1 to i32
    %c0_i32_10 = arith.constant 0 : i32
    %12 = arith.cmpi ne, %11, %c0_i32_10 : i32
    scf.if %12 {
      %c0_11 = arith.constant 0 : index
      %c0_12 = arith.constant 0 : index
      %13 = vector.load %arg8[%c0_11, %c0_12] : memref<32x128xf32, #tpu.memory_space<vmem>>, vector<32x128xf32>
      %c0_13 = arith.constant 0 : index
      %c0_14 = arith.constant 0 : index
      %c0_15 = arith.constant 0 : index
      %14 = vector.load %arg6[%c0_13, %c0_14, %c0_15] : memref<1x1x128xf32, #tpu.memory_space<vmem>>, vector<1x1x128xf32>
      %15 = vector.shape_cast %14 : vector<1x1x128xf32> to vector<1x128xf32>
      %16 = vector.broadcast %15 : vector<1x128xf32> to vector<32x128xf32>
      %17 = arith.addf %13, %16 : vector<32x128xf32>
      %c0_16 = arith.constant 0 : index
      %c0_17 = arith.constant 0 : index
      %18 = vector.load %arg7[%c0_16, %c0_17] : memref<32x128xf32, #tpu.memory_space<vmem>>, vector<32x128xf32>
      tpu.vector_store %arg7[%c0_16, %c0_17], %17 {strides = array<i32>} : memref<32x128xf32, #tpu.memory_space<vmem>>, vector<32x128xf32>,
    } else {
    }
    return
  }
  func.func @transform_0(%arg0: i32, %arg1: i32, %arg2: i32, %arg3: memref<3xi32, #tpu.memory_space<smem>>) -> (i32, i32) {
    %c0_i32 = arith.constant 0 : i32
    return %arg0, %arg2 : i32, i32
  }
  func.func @transform_1(%arg0: i32, %arg1: i32, %arg2: i32, %arg3: memref<3xi32, #tpu.memory_space<smem>>) -> (i32, i32, i32) {
    %0 = arith.index_cast %arg0 : i32 to index
    %1 = memref.load %arg3[%0] : memref<3xi32, #tpu.memory_space<smem>>
    %c0_i32 = arith.constant 0 : i32
    return %1, %arg2, %arg1 : i32, i32, i32
  }
  func.func @transform_2(%arg0: i32, %arg1: i32, %arg2: i32, %arg3: memref<3xi32, #tpu.memory_space<smem>>) -> (i32, i32, i32) {
    %0 = arith.index_cast %arg0 : i32 to index
    %1 = memref.load %arg3[%0] : memref<3xi32, #tpu.memory_space<smem>>
    %c0_i32 = arith.constant 0 : i32
    %c0_i32_0 = arith.constant 0 : i32
    return %1, %c0_i32, %arg1 : i32, i32, i32
  }
  func.func @transform_3(%arg0: i32, %arg1: i32, %arg2: i32, %arg3: memref<3xi32, #tpu.memory_space<smem>>) -> (i32, i32) {
    %c0_i32 = arith.constant 0 : i32
    return %arg0, %arg1 : i32, i32
  }
}

</mosaic_0001>

<llo_original>
// kernel: tpu_custom_call.1
$region0: #{tpu_custom_call.1}
  #allocation0 [shape = 'u32[]', space=smem, size = 0x4, offset = 0x4, fixed_abs, tag = 'smem constant byte address 0x4 - core index']
  #allocation1 [shape = 'u32[144,128]{1,0:T(1,128)}', space=vmem, size = 0x12000, scoped, tag = 'internal scratch']
  #allocation2 [shape = 'f32[32,128]{1,0:T(8,128)}', space=vmem, size = 0x4000, scoped, tag = 'scratch operand']
  #allocation3 [shape = 's32[1]{0}', space=sflag, size = 0x4, scoped, tag = 'scoped memory for tpu_custom_call.1']
  #allocation4 [shape = 'u8[512]{0}', space=smem, size = 0x200, scoped, tag = 'prefetched SMEM operand 0']
  %s0 = inlined_call_operand.hbm [shape: s32[3], index: 0, kind: input, shape index: {}]
  %s1 = inlined_call_operand.hbm [shape: bf16[96,128], index: 1, kind: input, shape index: {}]
  %s2 = inlined_call_operand.hbm [shape: bf16[3,128,128], index: 2, kind: input, shape index: {}]
  %s3 = inlined_call_operand.vmem [shape: f32[3,1,128], index: 3, kind: input, shape index: {}]
  %s4 = inlined_call_operand.hbm [shape: f32[96,128], index: 4, kind: output, shape index: {}]
  %s5 = sld [smem:[#allocation0]]
  $region61: #{tpu_custom_call.1} parent=0
    _
  %s7 = ssub.s32 1, %s5
  %s8 = scalar_select 0, %s7, %s5
  %10 = dma.hbm_to_smem %s0, 16, [#allocation4], [#allocation3]
  %11 = dma.done [#allocation3], 16
  %12 = sfence
  $region1: #{tpu_custom_call.1} parent=0
    #allocation5 [shape = 'u8[16384]{0}', space=vmem, size = 0x4000, scoped, tag = 'input window, operand 1']
    #allocation6 [shape = 's32[2]{0}', space=sflag, size = 0x8, scoped, tag = 'scoped memory for tpu_custom_call.1']
    #allocation7 [shape = 's32[2]{0}', space=sflag, size = 0x8, scoped, tag = 'scoped memory for tpu_custom_call.1']
    #allocation8 [shape = 'u8[65536]{0}', space=vmem, size = 0x10000, scoped, tag = 'input window, operand 2']
    #allocation9 [shape = 's32[2]{0}', space=sflag, size = 0x8, scoped, tag = 'scoped memory for tpu_custom_call.1']
    #allocation10 [shape = 'u8[32768]{0}', space=vmem, size = 0x8000, scoped, tag = 'output window, operand 0']
    %13 = vsyncpa [#allocation6], 0
    %s14 = scalar_lea.sflag [#allocation6], 1
    %15 = vsyncpa %s14, 0
    %16 = vsyncpa [#allocation9], 0
    %s17 = scalar_lea.sflag [#allocation9], 1
    %18 = vsyncpa %s17, 0
    %19 = vsyncpa [#allocation7], 0
    %s20 = scalar_lea.sflag [#allocation7], 1
    %21 = vsyncpa %s20, 0
    loop: start=0, step=1, limit=5
    $region2: #{tpu_custom_call.1} parent=1 // loop_pre_header
      _
    $region3: #{tpu_custom_call.1} parent=1 // loop_header
      %s23 = sphi 0, %s27
      %p24 = scmp.ge.s32.totalorder %s23, 5
      %s30 = sphi 0, %s49
      %s31 = sphi 0, %s45
      %s32 = sphi 0, %s41
      %s33 = sphi 0, %s30
      %s34 = sphi 0, %s31
      %s35 = sphi 0, %s32
      %s36 = sphi 0, %s33
      %s37 = sphi 0, %s34
      %s38 = sphi 0, %s35
      %s54 = sphi 0, %s56
      %s57 = sphi 0, %s54
      %s58 = sphi 0, %s57
      %s74 = sphi 0, %s58
      %s86 = sphi 0, %s88
      %s89 = sphi 0, %s86
      %s90 = sphi 0, %s89
      %s106 = sphi 0, %s90
      %s116 = sphi 0, %s118
      %s119 = sphi 0, %s116
      %s120 = sphi 0, %s119
      %s136 = sphi 0, %s120
      %s144 = sphi 0, %s146
      %s147 = sphi 0, %s144
      %s148 = sphi 0, %s147
      %s164 = sphi 0, %s148
    $region4: #{tpu_custom_call.1} parent=1 // loop_header_branch
      %26 = sbr.rel (%p24) target = $region8
    $region5: #{tpu_custom_call.1} parent=1 // loop_body
      %s28 = ssub.s32 %s23, 1
      %s29 = ssub.s32 %s23, 2
      %s39 = sadd.s32 1, %s32
      %p40 = scmp.ge.s32.totalorder %s39, 1
      %s41 = scalar_select %p40, 0, %s39
      %s42 = sadd.s32 1, %s31
      %s43 = scalar_select %p40, %s42, %s31
      %p44 = scmp.ge.s32.totalorder %s43, 1
      %s45 = scalar_select %p44, 0, %s43
      %s46 = sadd.s32 1, %s30
      %s47 = scalar_select %p44, %s46, %s30
      %p48 = scmp.ge.s32.totalorder %s47, 3
      %s49 = scalar_select %p48, 0, %s47
      %s50 = ssub.s32 %s30, %s49
      %s51 = ssub.s32 %s32, %s41
      %s52 = sor.u32 %s50, %s51
      %p53 = scmp.eq.s32.totalorder %s52, 0
      %s55 = sadd.s32 %s54, 1
      %s56 = scalar_select %p53, %s54, %s55
      %p59 = pneg %p53
      %p60 = scmp.eq.s32.totalorder %s23, 2
      %p61 = por %p59, %p60
      %p62 = scmp.ne.s32.totalorder %s54, %s57
      %p63 = scmp.eq.s32.totalorder %s23, 0
      %p64 = por %p62, %p63
      %p65 = scmp.ne.s32.totalorder %s54, %s57
      %p66 = scmp.eq.s32.totalorder %s28, 2
      %p67 = por %p65, %p66
      %p68 = scmp.ne.s32.totalorder %s57, %s58
      %p69 = scmp.eq.s32.totalorder %s28, 0
      %p70 = por %p68, %p69
      %p71 = scmp.ne.s32.totalorder %s57, %s58
      %p72 = scmp.eq.s32.totalorder %s29, 2
      %p73 = por %p71, %p72
      %p75 = scmp.ne.s32.totalorder %s58, %s74
      %p76 = scmp.eq.s32.totalorder %s29, 0
      %p77 = por %p75, %p76
      %s78 = sld [smem:[#allocation4 + %s30]]
      %s79 = sld [smem:[#allocation4 + %s49]]
      %s80 = ssub.s32 %s78, %s79
      %s81 = ssub.s32 %s32, %s41
      %s82 = sor.u32 %s80, %s81
      %s83 = ssub.s32 %s31, %s45
      %s84 = sor.u32 %s82, %s83
      %p85 = scmp.eq.s32.totalorder %s84, 0
      %s87 = sadd.s32 %s86, 1
      %s88 = scalar_select %p85, %s86, %s87
      %p91 = pneg %p85
      %p92 = scmp.eq.s32.totalorder %s23, 2
      %p93 = por %p91, %p92
      %p94 = scmp.ne.s32.totalorder %s86, %s89
      %p95 = scmp.eq.s32.totalorder %s23, 0
      %p96 = por %p94, %p95
      %p97 = scmp.ne.s32.totalorder %s86, %s89
      %p98 = scmp.eq.s32.totalorder %s28, 2
      %p99 = por %p97, %p98
      %p100 = scmp.ne.s32.totalorder %s89, %s90
      %p101 = scmp.eq.s32.totalorder %s28, 0
      %p102 = por %p100, %p101
      %p103 = scmp.ne.s32.totalorder %s89, %s90
      %p104 = scmp.eq.s32.totalorder %s29, 2
      %p105 = por %p103, %p104
      %p107 = scmp.ne.s32.totalorder %s90, %s106
      %p108 = scmp.eq.s32.totalorder %s29, 0
      %p109 = por %p107, %p108
      %s110 = sld [smem:[#allocation4 + %s30]]
      %s111 = sld [smem:[#allocation4 + %s49]]
      %s112 = ssub.s32 %s110, %s111
      %s113 = ssub.s32 %s31, %s45
      %s114 = sor.u32 %s112, %s113
      %p115 = scmp.eq.s32.totalorder %s114, 0
      %s117 = sadd.s32 %s116, 1
      %s118 = scalar_select %p115, %s116, %s117
      %p121 = pneg %p115
      %p122 = scmp.eq.s32.totalorder %s23, 2
      %p123 = por %p121, %p122
      %p124 = scmp.ne.s32.totalorder %s116, %s119
      %p125 = scmp.eq.s32.totalorder %s23, 0
      %p126 = por %p124, %p125
      %p127 = scmp.ne.s32.totalorder %s116, %s119
      %p128 = scmp.eq.s32.totalorder %s28, 2
      %p129 = por %p127, %p128
      %p130 = scmp.ne.s32.totalorder %s119, %s120
      %p131 = scmp.eq.s32.totalorder %s28, 0
      %p132 = por %p130, %p131
      %p133 = scmp.ne.s32.totalorder %s119, %s120
      %p134 = scmp.eq.s32.totalorder %s29, 2
      %p135 = por %p133, %p134
      %p137 = scmp.ne.s32.totalorder %s120, %s136
      %p138 = scmp.eq.s32.totalorder %s29, 0
      %p139 = por %p137, %p138
      %s140 = ssub.s32 %s30, %s49
      %s141 = ssub.s32 %s31, %s45
      %s142 = sor.u32 %s140, %s141
      %p143 = scmp.eq.s32.totalorder %s142, 0
      %s145 = sadd.s32 %s144, 1
      %s146 = scalar_select %p143, %s144, %s145
      %p149 = pneg %p143
      %p150 = scmp.eq.s32.totalorder %s23, 2
      %p151 = por %p149, %p150
      %p152 = scmp.ne.s32.totalorder %s144, %s147
      %p153 = scmp.eq.s32.totalorder %s23, 0
      %p154 = por %p152, %p153
      %p155 = scmp.ne.s32.totalorder %s144, %s147
      %p156 = scmp.eq.s32.totalorder %s28, 2
      %p157 = por %p155, %p156
      %p158 = scmp.ne.s32.totalorder %s147, %s148
      %p159 = scmp.eq.s32.totalorder %s28, 0
      %p160 = por %p158, %p159
      %p161 = scmp.ne.s32.totalorder %s147, %s148
      %p162 = scmp.eq.s32.totalorder %s29, 2
      %p163 = por %p161, %p162
      %p165 = scmp.ne.s32.totalorder %s148, %s164
      %p166 = scmp.eq.s32.totalorder %s29, 0
      %p167 = por %p165, %p166
      %p168 = scmp.le.s32.totalorder 1, %s23
      %p169 = scmp.lt.s32.totalorder %s23, 4
      %p170 = pnand %p168, %p169
      %p171 = pneg %p170
      // Predicated region
      $region9: #{tpu_custom_call.1} parent=5 // pred_check
        _
      $region10: #{tpu_custom_call.1} parent=5 // pred_check_branch
        %173 = sbr.rel (%p170) target = $region12
      $region11: #{tpu_custom_call.1} parent=5 // pred_region
        %s174 = ssub.s32 %s23, 1
      $region12: #{tpu_custom_call.1} parent=5 // pred_fallthru
        _
      %p175 = scmp.lt.s32.totalorder %s23, 3
      // Predicated region
      $region13: #{tpu_custom_call.1} parent=5 // pred_check
        %p176 = pneg %p175
      $region14: #{tpu_custom_call.1} parent=5 // pred_check_branch
        %178 = sbr.rel (%p176) target = $region16
      $region15: #{tpu_custom_call.1} parent=5 // pred_region
        // Predicated region
        $region17: #{tpu_custom_call.1} parent=15 // pred_check
          %p179 = pneg %p64
        $region18: #{tpu_custom_call.1} parent=15 // pred_check_branch
          %181 = sbr.rel (%p179) target = $region20
        $region19: #{tpu_custom_call.1} parent=15 // pred_region
          %s182 = sand.u32 %s54, 1
          %s183 = scalar_lea.sflag [#allocation6], %s182
          %s184 = sand.u32 %s54, 1
          %s185 = smul.addr %s184, 16
          %s186 = scalar_lea.vmem [#allocation5], %s185
          %s187 = smul.u32 4, %s30
          %s189 = ssub.s32 256, 256
          %190 = vsyncadd %s183, %s189
          %s191 = sadd.s32 %s32, %s187
          %s192 = smul.addr %s191, 64
          %s193 = scalar_lea.hbm %s1, %s192
          %s194 = sshll.u32 %s186, 4
          %s195 = int_to_ptr.vmem [resolvable:$true] %s194
          %200 = dma.hbm_to_vmem [thread:$0]  %s193, 256, %s195, %s183, 64, 64, 4
        $region20: #{tpu_custom_call.1} parent=15 // pred_fallthru
          _
        // Predicated region
        $region21: #{tpu_custom_call.1} parent=15 // pred_check
          %p201 = pneg %p96
        $region22: #{tpu_custom_call.1} parent=15 // pred_check_branch
          %203 = sbr.rel (%p201) target = $region24
        $region23: #{tpu_custom_call.1} parent=15 // pred_region
          %s204 = sand.u32 %s86, 1
          %s205 = scalar_lea.sflag [#allocation9], %s204
          %s206 = sand.u32 %s86, 1
          %s207 = smul.addr %s206, 64
          %s208 = scalar_lea.vmem [#allocation8], %s207
          %s209 = sld [smem:[#allocation4 + %s30]]
          %s210 = smul.u32 16, %s32
          %s212 = ssub.s32 1024, 1024
          %213 = vsyncadd %s205, %s212
          %s214 = sadd.s32 %s31, %s210
          %s215 = smul.addr %s209, 16
          %s216 = sadd.s32 %s214, %s215
          %s217 = smul.addr %s216, 64
          %s218 = scalar_lea.hbm %s2, %s217
          %s219 = sshll.u32 %s208, 4
          %s220 = int_to_ptr.vmem [resolvable:$true] %s219
          %225 = dma.hbm_to_vmem [thread:$0]  %s218, 1024, %s220, %s205, 64, 64, 4
        $region24: #{tpu_custom_call.1} parent=15 // pred_fallthru
          _
        // Predicated region
        $region25: #{tpu_custom_call.1} parent=15 // pred_check
          %p226 = pneg %p126
        $region26: #{tpu_custom_call.1} parent=15 // pred_check_branch
          %228 = sbr.rel (%p226) target = $region28
        $region27: #{tpu_custom_call.1} parent=15 // pred_region
          %s229 = sld [smem:[#allocation4 + %s30]]
          %p230 = scmp.lt.s32.totalorder %s229, 2
          %s231 = scalar_select %p230, %s229, 2
          %p232 = scmp.lt.s32.totalorder %s31, 0
          %s233 = scalar_select %p232, %s31, 0
          %s234 = sadd.s32 %s233, %s231
          %s235 = scalar_lea.vmem %s3, %s234
          %s236 = sld [smem:[#allocation4 + %s30]]
        $region28: #{tpu_custom_call.1} parent=15 // pred_fallthru
          _
      $region16: #{tpu_custom_call.1} parent=5 // pred_fallthru
        _
      %p237 = scmp.le.s32.totalorder 1, %s23
      %p238 = scmp.lt.s32.totalorder %s23, 4
      %p239 = pnand %p237, %p238
      %p240 = pneg %p239
      // Predicated region
      $region29: #{tpu_custom_call.1} parent=5 // pred_check
        _
      $region30: #{tpu_custom_call.1} parent=5 // pred_check_branch
        %242 = sbr.rel (%p239) target = $region32
      $region31: #{tpu_custom_call.1} parent=5 // pred_region
        %s243 = ssub.s32 %s23, 1
        %s244 = sand.u32 %s57, 1
        %s245 = scalar_lea.sflag [#allocation6], %s244
        %s246 = sand.u32 %s57, 1
        %s247 = smul.addr %s246, 16
        %s248 = scalar_lea.vmem [#allocation5], %s247
        // Predicated region
        $region33: #{tpu_custom_call.1} parent=31 // pred_check
          %p249 = pneg %p70
        $region34: #{tpu_custom_call.1} parent=31 // pred_check_branch
          %251 = sbr.rel (%p249) target = $region36
        $region35: #{tpu_custom_call.1} parent=31 // pred_region
          %252 = dma.done %s245, 256
        $region36: #{tpu_custom_call.1} parent=31 // pred_fallthru
          _
        %s253 = sand.u32 %s89, 1
        %s254 = scalar_lea.sflag [#allocation9], %s253
        %s255 = sand.u32 %s89, 1
        %s256 = smul.addr %s255, 64
        %s257 = scalar_lea.vmem [#allocation8], %s256
        // Predicated region
        $region37: #{tpu_custom_call.1} parent=31 // pred_check
          %p258 = pneg %p102
        $region38: #{tpu_custom_call.1} parent=31 // pred_check_branch
          %260 = sbr.rel (%p258) target = $region40
        $region39: #{tpu_custom_call.1} parent=31 // pred_region
          %261 = dma.done %s254, 1024
        $region40: #{tpu_custom_call.1} parent=31 // pred_fallthru
          _
        %s262 = sand.u32 %s57, 1
        %s263 = scalar_lea.sflag [#allocation6], %s262
        %s264 = sand.u32 %s57, 1
        %s265 = smul.addr %s264, 16
        %s266 = scalar_lea.vmem [#allocation5], %s265
        %p267 = pneg %p70
        %p268 = pneg %p67
        %s269 = sand.u32 %s89, 1
        %s270 = scalar_lea.sflag [#allocation9], %s269
        %s271 = sand.u32 %s89, 1
        %s272 = smul.addr %s271, 64
        %s273 = scalar_lea.vmem [#allocation8], %s272
        %p274 = pneg %p102
        %p275 = pneg %p99
        %s276 = sld [smem:[#allocation4 + %s33]]
        %p277 = scmp.lt.s32.totalorder %s276, 2
        %s278 = scalar_select %p277, %s276, 2
        %p279 = scmp.lt.s32.totalorder %s34, 0
        %s280 = scalar_select %p279, %s34, 0
        %s281 = sadd.s32 %s280, %s278
        %s282 = scalar_lea.vmem %s3, %s281
        %p283 = pneg %p132
        %p284 = pneg %p129
        %p285 = pneg %p160
        %p286 = pneg %p157
        %s287 = sand.u32 %s147, 1
        %s288 = scalar_lea.sflag [#allocation7], %s287
        %s289 = sand.u32 %s147, 1
        %s290 = smul.addr %s289, 32
        %s291 = scalar_lea.vmem [#allocation10], %s290
        %s292 = smul.u32 4, %s33
        %s293 = sld [smem:[#allocation4 + %s33]]
        %s294 = smul.u32 16, %s35
        %s295 = sld [smem:[#allocation4 + %s33]]
        %p296 = scmp.lt.s32.totalorder %s295, 2
        %s297 = scalar_select %p296, %s295, 2
        %p298 = scmp.lt.s32.totalorder %s34, 0
        %s299 = scalar_select %p298, %s34, 0
        %s300 = sadd.s32 %s299, %s297
        %s301 = scalar_lea.vmem %s3, %s300
        %s302 = sld [smem:[#allocation4 + %s33]]
        %s303 = smul.u32 4, %s33
        %p305 = scmp.eq.s32.totalorder %s35, 0
        // Predicated region
        $region41: #{tpu_custom_call.1} parent=31 // pred_check
          %p306 = pneg %p305
        $region42: #{tpu_custom_call.1} parent=31 // pred_check_branch
          %308 = sbr.rel (%p306) target = $region44
        $region43: #{tpu_custom_call.1} parent=31 // pred_region
          %309 = vst [vmem:[#allocation2] sm:$0xff] 0.0
          %310 = vst [vmem:[#allocation2 + $0x8] sm:$0xff] 0.0
          %311 = vst [vmem:[#allocation2 + $0x10] sm:$0xff] 0.0
          %312 = vst [vmem:[#allocation2 + $0x18] sm:$0xff] 0.0
        $region44: #{tpu_custom_call.1} parent=31 // pred_fallthru
          _
        %v313 = vld [vmem:[#allocation2] sm:$0xff]
        %v314 = vld [vmem:[#allocation2 + $0x8] sm:$0xff]
        %v315 = vld [vmem:[#allocation2 + $0x10] sm:$0xff]
        %v316 = vld [vmem:[#allocation2 + $0x18] sm:$0xff]
        %v317 = vld [vmem:[%s248] sm:$0xf]
        %v318 = vld [vmem:[%s248 + $0x4] sm:$0xf]
        %v319 = vld [vmem:[%s248 + $0x8] sm:$0xf]
        %v320 = vld [vmem:[%s248 + $0xc] sm:$0xf]
        %v321 = vld [vmem:[%s257] sm:$0xf]
        %v322 = vld [vmem:[%s257 + $0x4] sm:$0xf]
        %v323 = vld [vmem:[%s257 + $0x8] sm:$0xf]
        %v324 = vld [vmem:[%s257 + $0xc] sm:$0xf]
        %v325 = vld [vmem:[%s257 + $0x10] sm:$0xf]
        %v326 = vld [vmem:[%s257 + $0x14] sm:$0xf]
        %v327 = vld [vmem:[%s257 + $0x18] sm:$0xf]
        %v328 = vld [vmem:[%s257 + $0x1c] sm:$0xf]
        %v329 = vld [vmem:[%s257 + $0x20] sm:$0xf]
        %v330 = vld [vmem:[%s257 + $0x24] sm:$0xf]
        %v331 = vld [vmem:[%s257 + $0x28] sm:$0xf]
        %v332 = vld [vmem:[%s257 + $0x2c] sm:$0xf]
        %v333 = vld [vmem:[%s257 + $0x30] sm:$0xf]
        %v334 = vld [vmem:[%s257 + $0x34] sm:$0xf]
        %v335 = vld [vmem:[%s257 + $0x38] sm:$0xf]
        %v336 = vld [vmem:[%s257 + $0x3c] sm:$0xf]
        %v341 = vunpack.c.l.b16 %v317
        %v342 = vunpack.c.l.b16 %v318
        %v343 = vunpack.c.l.b16 %v319
        %v344 = vunpack.c.l.b16 %v320
        %v345 = vpack.c.b16 %v342, %v341
        %v346 = vpack.c.b16 %v344, %v343
        %v365 = vunpack.c.l.b16 %v321
        %v366 = vunpack.c.l.b16 %v322
        %v367 = vunpack.c.l.b16 %v323
        %v368 = vunpack.c.l.b16 %v324
        %v369 = vunpack.c.l.b16 %v325
        %v370 = vunpack.c.l.b16 %v326
        %v371 = vunpack.c.l.b16 %v327
        %v372 = vunpack.c.l.b16 %v328
        %v373 = vunpack.c.l.b16 %v329
        %v374 = vunpack.c.l.b16 %v330
        %v375 = vunpack.c.l.b16 %v331
        %v376 = vunpack.c.l.b16 %v332
        %v377 = vunpack.c.l.b16 %v333
        %v378 = vunpack.c.l.b16 %v334
        %v379 = vunpack.c.l.b16 %v335
        %v380 = vunpack.c.l.b16 %v336
        %v381 = vpack.c.b16 %v366, %v365
        %v382 = vpack.c.b16 %v368, %v367
        %v383 = vpack.c.b16 %v370, %v369
        %v384 = vpack.c.b16 %v372, %v371
        %v385 = vpack.c.b16 %v374, %v373
        %v386 = vpack.c.b16 %v376, %v375
        %v387 = vpack.c.b16 %v378, %v377
        %v388 = vpack.c.b16 %v380, %v379
        %397 = vmatprep.subr.bf16.mxu0 0
        %398 = vmatpush1.bf16.msra.mxu0 %v381
        %399 = vmatprep.subr.bf16.mxu0 0
        %400 = vmatpush1.bf16.msra.mxu0 %v382
        %401 = vmatprep.subr.bf16.mxu0 0
        %402 = vmatpush1.bf16.msra.mxu0 %v383
        %403 = vmatprep.subr.bf16.mxu0 0
        %404 = vmatpush1.bf16.msra.mxu0 %v384
        %405 = vmatprep.subr.bf16.mxu0 0
        %406 = vmatpush1.bf16.msra.mxu0 %v385
        %407 = vmatprep.subr.bf16.mxu0 0
        %408 = vmatpush1.bf16.msra.mxu0 %v386
        %409 = vmatprep.subr.bf16.mxu0 0
        %410 = vmatpush1.bf16.msra.mxu0 %v387
        %411 = vmatprep.subr.bf16.mxu0 0
        %412 = vmatpush1.bf16.msra.mxu0 %v388
        %413 = vmatprep.subr.bf16.mxu0 0
        %414 = vmatpush1.bf16.msra.mxu0 0
        %415 = vmatprep.subr.bf16.mxu0 0
        %416 = vmatpush1.bf16.msra.mxu0 0
        %417 = vmatprep.subr.bf16.mxu0 0
        %418 = vmatpush1.bf16.msra.mxu0 0
        %419 = vmatprep.subr.bf16.mxu0 0
        %420 = vmatpush1.bf16.msra.mxu0 0
        %421 = vmatprep.subr.bf16.mxu0 0
        %422 = vmatpush1.bf16.msra.mxu0 0
        %423 = vmatprep.subr.bf16.mxu0 0
        %424 = vmatpush1.bf16.msra.mxu0 0
        %425 = vmatprep.subr.bf16.mxu0 0
        %426 = vmatpush1.bf16.msra.mxu0 0
        %427 = vmatprep.subr.bf16.mxu0 0
        %428 = vmatpush1.bf16.msra.mxu0 0
        %429 = vmatprep.mubr.bf16.mxu0 0
        %430 = vmatmul.mubr.bf16.gmra.mrb[0].mxu0 %v345
        %v431 = vpop.f32.mrb[0].mxu0
        %v432 = vadd.f32 0.0, %v431
        %v433 = vpop.f32.mrb[0].mxu0
        %v434 = vpop.f32.mrb[0].mxu0
        %v435 = vadd.f32 0.0, %v434
        %v436 = vpop.f32.mrb[0].mxu0
        %437 = vmatprep.mubr.bf16.mxu0 0
        %438 = vmatmul.mubr.bf16.gmra.mrb[0].mxu0 %v346
        %v439 = vpop.f32.mrb[0].mxu0
        %v440 = vadd.f32 0.0, %v439
        %v441 = vpop.f32.mrb[0].mxu0
        %v442 = vpop.f32.mrb[0].mxu0
        %v443 = vadd.f32 0.0, %v442
        %v444 = vpop.f32.mrb[0].mxu0
        %445 = vdwg.mxu0
        %v446 = vadd.f32 %v313, %v432
        %v447 = vadd.f32 %v314, %v435
        %v448 = vadd.f32 %v315, %v440
        %v449 = vadd.f32 %v316, %v443
        %450 = vst [vmem:[#allocation2] sm:$0xff] %v446
        %451 = vst [vmem:[#allocation2 + $0x8] sm:$0xff] %v447
        %452 = vst [vmem:[#allocation2 + $0x10] sm:$0xff] %v448
        %453 = vst [vmem:[#allocation2 + $0x18] sm:$0xff] %v449
        // Predicated region
        $region45: #{tpu_custom_call.1} parent=31 // pred_check
          %p454 = pneg %p305
        $region46: #{tpu_custom_call.1} parent=31 // pred_check_branch
          %456 = sbr.rel (%p454) target = $region48
        $region47: #{tpu_custom_call.1} parent=31 // pred_region
          %v457 = vld [vmem:[#allocation2] sm:$0xff]
          %v458 = vld [vmem:[#allocation2 + $0x8] sm:$0xff]
          %v459 = vld [vmem:[#allocation2 + $0x10] sm:$0xff]
          %v460 = vld [vmem:[#allocation2 + $0x18] sm:$0xff]
          %v461 = vld [vmem:[%s301] sm:$0x1]
          %v463 = vlaneseq
          %v464 = vshrl.u32 %v463, 7
          %v465 = vsub.s32 0, %v464
          %v466 = vrot.slane %v461, %v465
          %v468 = vadd.f32 %v457, %v466
          %v469 = vadd.f32 %v458, %v466
          %v470 = vadd.f32 %v459, %v466
          %v471 = vadd.f32 %v460, %v466
          %472 = vst [vmem:[%s291] sm:$0xff] %v468
          %473 = vst [vmem:[%s291 + $0x8] sm:$0xff] %v469
          %474 = vst [vmem:[%s291 + $0x10] sm:$0xff] %v470
          %475 = vst [vmem:[%s291 + $0x18] sm:$0xff] %v471
        $region48: #{tpu_custom_call.1} parent=31 // pred_fallthru
          _
        %s476 = sand.u32 %s147, 1
        %s477 = scalar_lea.sflag [#allocation7], %s476
        %s478 = sand.u32 %s147, 1
        %s479 = smul.addr %s478, 32
        %s480 = scalar_lea.vmem [#allocation10], %s479
        // Predicated region
        $region49: #{tpu_custom_call.1} parent=31 // pred_check
          %p481 = pneg %p157
        $region50: #{tpu_custom_call.1} parent=31 // pred_check_branch
          %483 = sbr.rel (%p481) target = $region52
        $region51: #{tpu_custom_call.1} parent=31 // pred_region
          %s484 = smul.u32 4, %s33
          %s486 = ssub.s32 512, 512
          %487 = vsyncadd %s477, %s486
          %s488 = sadd.s32 %s34, %s484
          %s489 = smul.addr %s488, 128
          %s490 = scalar_lea.hbm %s4, %s489
          %s491 = sshll.u32 %s480, 4
          %s492 = int_to_ptr.vmem [resolvable:$true] %s491
          %497 = dma.vmem_to_hbm [thread:$0]  %s492, 512, %s490, %s477, 128, 128, 8
        $region52: #{tpu_custom_call.1} parent=31 // pred_fallthru
          _
      $region32: #{tpu_custom_call.1} parent=5 // pred_fallthru
        _
      %p498 = scmp.le.s32.totalorder 2, %s23
      // Predicated region
      $region53: #{tpu_custom_call.1} parent=5 // pred_check
        %p499 = pneg %p498
      $region54: #{tpu_custom_call.1} parent=5 // pred_check_branch
        %501 = sbr.rel (%p499) target = $region56
      $region55: #{tpu_custom_call.1} parent=5 // pred_region
        %s502 = ssub.s32 %s23, 2
        // Predicated region
        $region57: #{tpu_custom_call.1} parent=55 // pred_check
          %p503 = pneg %p163
        $region58: #{tpu_custom_call.1} parent=55 // pred_check_branch
          %505 = sbr.rel (%p503) target = $region60
        $region59: #{tpu_custom_call.1} parent=55 // pred_region
          %s506 = sand.u32 %s148, 1
          %s507 = scalar_lea.sflag [#allocation7], %s506
          %s508 = sand.u32 %s148, 1
          %s509 = smul.addr %s508, 32
          %s510 = scalar_lea.vmem [#allocation10], %s509
          %511 = dma.done %s507, 512
        $region60: #{tpu_custom_call.1} parent=55 // pred_fallthru
          _
      $region56: #{tpu_custom_call.1} parent=5 // pred_fallthru
        _
    $region6: #{tpu_custom_call.1} parent=1 // loop_footer
      %s27 = sadd.s32 1, %s23
    $region7: #{tpu_custom_call.1} parent=1 // loop_footer_branch
      %22 = sbr.rel target = $region3
    $region8: #{tpu_custom_call.1} parent=1 // loop_exit
      _
    %512 = vsyncpa [#allocation6], 1
    %s513 = scalar_lea.sflag [#allocation6], 1
    %514 = vsyncpa %s513, 1
    %515 = vsyncpa [#allocation9], 1
    %s516 = scalar_lea.sflag [#allocation9], 1
    %517 = vsyncpa %s516, 1
    %518 = vsyncpa [#allocation7], 1
    %s519 = scalar_lea.sflag [#allocation7], 1
    %520 = vsyncpa %s519, 1

</llo_original>
